<compile_context>
chip_gen: v7x
topology: tpu7x:2x2x1
jax: 0.10.0
libtpu: 0.0.40
codegen_flags: <defaults>
</compile_context>

<pallas_src>
import functools

import jax
import jax.numpy as jnp
from jax.experimental import pallas as pl
from jax.experimental.pallas import tpu as pltpu


def _sdpa_kernel(*refs, H, scale_factor, dropout_p, needs_rng):
    if needs_rng:
        seed_ref, q_ref, k_ref, v_ref, o_ref = refs
    else:
        q_ref, k_ref, v_ref, o_ref = refs
        seed_ref = None

    # torch.nn.functional.dropout(p=1) drops every element -> output is zeros.
    # Skip both matmuls, the softmax and the PRNG entirely (trace-time branch).
    if dropout_p >= 1.0:
        o_ref[...] = jnp.zeros_like(o_ref)
        return

    q = q_ref[0]  # (H, Lq, D)
    k = k_ref[0]  # (H, Lk, D)
    v = v_ref[0]  # (H, Lk, Dv)

    # Fold the scale into q (Lq*D elements instead of Lq*Lk logits).
    if scale_factor != 1.0:
        q = q * jnp.asarray(scale_factor, dtype=q.dtype)

    # q @ k^T without materializing a transpose: contract the D axis directly.
    s = jnp.einsum("hqd,hkd->hqk", q, k,
                   preferred_element_type=jnp.float32)  # (H, Lq, Lk)

    # Softmax over the key axis (EUP exp + approx EUP reciprocal).
    m = jnp.max(s, axis=-1, keepdims=True)
    e = jnp.exp(s - m)
    p = e * pl.reciprocal(jnp.sum(e, axis=-1, keepdims=True), approx=True)

    if needs_rng:
        # Seed once per (collapsed) grid step; one stream per batch element.
        pltpu.prng_seed(seed_ref[0] + pl.program_id(0))
        bits = pltpu.bitcast(pltpu.prng_random_bits(p.shape), jnp.int32)
        # keep iff uniform_u32 >= p * 2^32
        #   <=> (bits viewed as signed int32) >= p * 2^32 - 2^31
        # Pure integer compare: no shift, no int->float convert.
        thresh = min(int(round(dropout_p * 4294967296.0)), 4294967295) - 2147483648
        keep = bits >= jnp.int32(thresh)
        p = jnp.where(keep, p * (1.0 / (1.0 - dropout_p)), 0.0)

    # dropout(softmax(qk)) @ value, batched over heads; feed the MXU in the
    # value dtype (bf16-friendly on v6e/v7x, no-op for f32 inputs).
    o = jnp.einsum("hqk,hkv->hqv", p.astype(v.dtype), v,
                   preferred_element_type=jnp.float32)  # (H, Lq, Dv)

    # Assemble the lane-dense (Lq, H*Dv) slab and store it with wide vst.
    o_flat = jnp.concatenate([o[h] for h in range(H)], axis=-1)
    o_ref[0] = o_flat.astype(o_ref.dtype)


def sdpa_pallas(query, key, value, scale_factor, dropout_p, seed=0):
    B, H, Lq, D = query.shape
    Bk, Hk, Lk, Dk = key.shape
    Bv, Hv, Lv, Dv = value.shape
    assert (B, H) == (Bk, Hk) == (Bv, Hv)
    assert Dk == D, "query/key head dims must match for q @ k^T"
    assert Lv == Lk, "key/value sequence lengths must match"

    scale_factor = float(scale_factor)
    dropout_p = float(dropout_p)
    needs_rng = 0.0 < dropout_p < 1.0
    out_dtype = query.dtype  # output dtype follows the input dtype

    kernel = functools.partial(
        _sdpa_kernel,
        H=H,
        scale_factor=scale_factor,
        dropout_p=dropout_p,
        needs_rng=needs_rng,
    )

    # TODO(synk): for long sequences, switch to flash-style Lk tiling with a
    # pl.when-gated accumulator so the working set fits v7x's 64 MiB VMEM.
    if needs_rng:
        grid_spec = pltpu.PrefetchScalarGridSpec(
            num_scalar_prefetch=1,
            grid=(B,),
            in_specs=[
                pl.BlockSpec((1, H, Lq, D), lambda b, sd: (b, 0, 0, 0)),
                pl.BlockSpec((1, H, Lk, D), lambda b, sd: (b, 0, 0, 0)),
                pl.BlockSpec((1, H, Lk, Dv), lambda b, sd: (b, 0, 0, 0)),
            ],
            out_specs=pl.BlockSpec((1, Lq, H * Dv), lambda b, sd: (b, 0, 0)),
        )
        args = (jnp.array([seed], dtype=jnp.int32), query, key, value)
    else:
        grid_spec = pltpu.PrefetchScalarGridSpec(
            num_scalar_prefetch=0,
            grid=(B,),
            in_specs=[
                pl.BlockSpec((1, H, Lq, D), lambda b: (b, 0, 0, 0)),
                pl.BlockSpec((1, H, Lk, D), lambda b: (b, 0, 0, 0)),
                pl.BlockSpec((1, H, Lk, Dv), lambda b: (b, 0, 0, 0)),
            ],
            out_specs=pl.BlockSpec((1, Lq, H * Dv), lambda b: (b, 0, 0)),
        )
        args = (query, key, value)

    out_flat = pl.pallas_call(
        kernel,
        out_shape=jax.ShapeDtypeStruct((B, Lq, H * Dv), out_dtype),
        grid_spec=grid_spec,
        compiler_params=pltpu.CompilerParams(dimension_semantics=("parallel",)),
    )(*args)

    # (B, Lq, H*Dv) lane-dense slab -> (B, H, Lq, Dv) PyTorch layout.
    return jnp.transpose(out_flat.reshape(B, Lq, H, Dv), (0, 2, 1, 3))


def sdpa_reference(query, key, value, scale_factor, dropout_p):
    # Pure-JAX reference. dropout_p >= 1 -> zeros; dropout_p == 0 -> identity.
    qk = jnp.einsum("bhqd,bhkd->bhqk", query, key) * scale_factor
    sm = jax.nn.softmax(qk, axis=-1)
    if dropout_p >= 1.0:
        sm = jnp.zeros_like(sm)
    return jnp.einsum("bhqk,bhkv->bhqv", sm, value)


if __name__ == "__main__":
    # Small shapes consistent with the module's matmul contract:
    #   query (B,H,Lq,D), key (B,H,Lk,D), value (B,H,Lk,Dv)
    B, H, Lq, Lk, D, Dv = 2, 4, 16, 32, 32, 64
    scale_factor = 1.0

    key0 = jax.random.PRNGKey(0)
    kq, kk, kv = jax.random.split(key0, 3)
    query = jax.random.normal(kq, (B, H, Lq, D), dtype=jnp.float32)
    key_t = jax.random.normal(kk, (B, H, Lk, D), dtype=jnp.float32)
    value = jax.random.normal(kv, (B, H, Lk, Dv), dtype=jnp.float32)

    # Case 1: the original script's configuration (dropout_p = 1 -> zeros).
    out1 = jax.block_until_ready(sdpa_pallas(query, key_t, value, scale_factor, 1.0))
    ref1 = sdpa_reference(query, key_t, value, scale_factor, 1.0)
    assert out1.shape == (B, H, Lq, Dv)
    assert out1.dtype == query.dtype
    assert jnp.allclose(out1, ref1, atol=1e-6), "dropout_p=1 mismatch vs reference"

    # Case 2: deterministic full path (dropout_p = 0) exercises QK^T, softmax
    # (approx reciprocal) and PV; tolerance covers the approximate EUP rcp.
    out0 = jax.block_until_ready(sdpa_pallas(query, key_t, value, scale_factor, 0.0))
    ref0 = sdpa_reference(query, key_t, value, scale_factor, 0.0)
    assert out0.shape == (B, H, Lq, Dv)
    assert jnp.allclose(out0, ref0, atol=5e-3, rtol=5e-3), "dropout_p=0 mismatch vs reference"

    print("KERNEL_OK")
</pallas_src>

<mosaic_0001>
module attributes {stable_mosaic.version = 11 : i64} {
  func.func @_sdpa_kernel(%arg0: i32, %arg1: memref<1x4x16x32xf32, #tpu.memory_space<vmem>>, %arg2: memref<1x4x32x32xf32, #tpu.memory_space<vmem>>, %arg3: memref<1x4x32x64xf32, #tpu.memory_space<vmem>>, %arg4: memref<1x16x256xf32, #tpu.memory_space<vmem>>) attributes {dimension_semantics = [#tpu.dimension_semantics<parallel>], iteration_bounds = array<i64: 2>, scalar_prefetch = 0 : i64, scratch_operands = 0 : i64, tpu.core_type = #tpu.core_type<tc>, window_params = [{transform_indices = @transform_0, window_bounds = array<i64: 1, 4, 16, 32>}, {transform_indices = @transform_1, window_bounds = array<i64: 1, 4, 32, 32>}, {transform_indices = @transform_2, window_bounds = array<i64: 1, 4, 32, 64>}, {transform_indices = @transform_3, window_bounds = array<i64: 1, 16, 256>}]} {
    %cst = arith.constant 0.000000e+00 : f32
    %0 = vector.broadcast %cst : f32 to vector<1x16x256xf32>
    %c0 = arith.constant 0 : index
    %c0_0 = arith.constant 0 : index
    %c0_1 = arith.constant 0 : index
    %1 = vector.load %arg4[%c0, %c0_0, %c0_1] : memref<1x16x256xf32, #tpu.memory_space<vmem>>, vector<1x16x256xf32>
    tpu.vector_store %arg4[%c0, %c0_0, %c0_1], %0 {strides = array<i32>} : memref<1x16x256xf32, #tpu.memory_space<vmem>>, vector<1x16x256xf32>,
    return
  }
  func.func @transform_0(%arg0: i32) -> (i32, i32, i32, i32) {
    %c0_i32 = arith.constant 0 : i32
    %c0_i32_0 = arith.constant 0 : i32
    %c0_i32_1 = arith.constant 0 : i32
    %c0_i32_2 = arith.constant 0 : i32
    return %arg0, %c0_i32, %c0_i32_0, %c0_i32_1 : i32, i32, i32, i32
  }
  func.func @transform_1(%arg0: i32) -> (i32, i32, i32, i32) {
    %c0_i32 = arith.constant 0 : i32
    %c0_i32_0 = arith.constant 0 : i32
    %c0_i32_1 = arith.constant 0 : i32
    %c0_i32_2 = arith.constant 0 : i32
    return %arg0, %c0_i32, %c0_i32_0, %c0_i32_1 : i32, i32, i32, i32
  }
  func.func @transform_2(%arg0: i32) -> (i32, i32, i32, i32) {
    %c0_i32 = arith.constant 0 : i32
    %c0_i32_0 = arith.constant 0 : i32
    %c0_i32_1 = arith.constant 0 : i32
    %c0_i32_2 = arith.constant 0 : i32
    return %arg0, %c0_i32, %c0_i32_0, %c0_i32_1 : i32, i32, i32, i32
  }
  func.func @transform_3(%arg0: i32) -> (i32, i32, i32) {
    %c0_i32 = arith.constant 0 : i32
    %c0_i32_0 = arith.constant 0 : i32
    %c0_i32_1 = arith.constant 0 : i32
    return %arg0, %c0_i32, %c0_i32_0 : i32, i32, i32
  }
}

</mosaic_0001>

<llo_original>
// kernel: tpu_custom_call.1
$region0: #{tpu_custom_call.1}
  #allocation0 [shape = 'u32[]', space=smem, size = 0x4, offset = 0x4, fixed_abs, tag = 'smem constant byte address 0x4 - core index']
  #allocation1 [shape = 'u32[144,128]{1,0:T(1,128)}', space=vmem, size = 0x12000, scoped, tag = 'internal scratch']
  %s0 = inlined_call_operand.hbm [shape: f32[2,4,16,32], index: 0, kind: input, shape index: {}]
  %s1 = inlined_call_operand.hbm [shape: f32[2,4,32,32], index: 1, kind: input, shape index: {}]
  %s2 = inlined_call_operand.hbm [shape: f32[2,4,32,64], index: 2, kind: input, shape index: {}]
  %s3 = inlined_call_operand.hbm [shape: f32[2,16,256], index: 3, kind: output, shape index: {}]
  %s4 = sld [smem:[#allocation0]]
  $region57: #{tpu_custom_call.1} parent=0
    _
  %s6 = ssub.s32 1, %s4
  %s7 = scalar_select 0, %s6, %s4
  $region1: #{tpu_custom_call.1} parent=0
    #allocation2 [shape = 'u8[65536]{0}', space=vmem, size = 0x10000, scoped, tag = 'input window, operand 0']
    #allocation3 [shape = 's32[2]{0}', space=sflag, size = 0x8, scoped, tag = 'scoped memory for tpu_custom_call.1']
    #allocation4 [shape = 's32[2]{0}', space=sflag, size = 0x8, scoped, tag = 'scoped memory for tpu_custom_call.1']
    #allocation5 [shape = 'u8[131072]{0}', space=vmem, size = 0x20000, scoped, tag = 'input window, operand 1']
    #allocation6 [shape = 's32[2]{0}', space=sflag, size = 0x8, scoped, tag = 'scoped memory for tpu_custom_call.1']
    #allocation7 [shape = 'u8[131072]{0}', space=vmem, size = 0x20000, scoped, tag = 'input window, operand 2']
    #allocation8 [shape = 'u8[32768]{0}', space=vmem, size = 0x8000, scoped, tag = 'output window, operand 0']
    %8 = vsyncpa [#allocation3], 0
    %s9 = scalar_lea.sflag [#allocation3], 1
    %10 = vsyncpa %s9, 0
    %11 = vsyncpa [#allocation6], 0
    %s12 = scalar_lea.sflag [#allocation6], 1
    %13 = vsyncpa %s12, 0
    %14 = vsyncpa [#allocation4], 0
    %s15 = scalar_lea.sflag [#allocation4], 1
    %16 = vsyncpa %s15, 0
    loop: start=0, step=1, limit=4
    $region2: #{tpu_custom_call.1} parent=1 // loop_pre_header
      _
    $region3: #{tpu_custom_call.1} parent=1 // loop_header
      %s18 = sphi 0, %s22
      %p19 = scmp.ge.s32.totalorder %s18, 4
      %s28 = sphi 0, %s30
      %s31 = sphi 0, %s28
      %s32 = sphi 0, %s31
      %s48 = sphi 0, %s32
      %s54 = sphi 0, %s56
      %s57 = sphi 0, %s54
      %s58 = sphi 0, %s57
      %s74 = sphi 0, %s58
      %s80 = sphi 0, %s82
      %s83 = sphi 0, %s80
      %s84 = sphi 0, %s83
      %s100 = sphi 0, %s84
      %s106 = sphi 0, %s108
      %s109 = sphi 0, %s106
      %s110 = sphi 0, %s109
      %s126 = sphi 0, %s110
    $region4: #{tpu_custom_call.1} parent=1 // loop_header_branch
      %21 = sbr.rel (%p19) target = $region8
    $region5: #{tpu_custom_call.1} parent=1 // loop_body
      %s23 = ssub.s32 %s18, 1
      %s24 = ssub.s32 %s18, 2
      %s25 = sadd.s32 %s18, 1
      %s26 = ssub.s32 %s18, %s25
      %p27 = scmp.eq.s32.totalorder %s26, 0
      %s29 = sadd.s32 %s28, 1
      %s30 = scalar_select %p27, %s28, %s29
      %p33 = pneg %p27
      %p34 = scmp.eq.s32.totalorder %s18, 1
      %p35 = por %p33, %p34
      %p36 = scmp.ne.s32.totalorder %s28, %s31
      %p37 = scmp.eq.s32.totalorder %s18, 0
      %p38 = por %p36, %p37
      %p39 = scmp.ne.s32.totalorder %s28, %s31
      %p40 = scmp.eq.s32.totalorder %s23, 1
      %p41 = por %p39, %p40
      %p42 = scmp.ne.s32.totalorder %s31, %s32
      %p43 = scmp.eq.s32.totalorder %s23, 0
      %p44 = por %p42, %p43
      %p45 = scmp.ne.s32.totalorder %s31, %s32
      %p46 = scmp.eq.s32.totalorder %s24, 1
      %p47 = por %p45, %p46
      %p49 = scmp.ne.s32.totalorder %s32, %s48
      %p50 = scmp.eq.s32.totalorder %s24, 0
      %p51 = por %p49, %p50
      %s52 = ssub.s32 %s18, %s25
      %p53 = scmp.eq.s32.totalorder %s52, 0
      %s55 = sadd.s32 %s54, 1
      %s56 = scalar_select %p53, %s54, %s55
      %p59 = pneg %p53
      %p60 = scmp.eq.s32.totalorder %s18, 1
      %p61 = por %p59, %p60
      %p62 = scmp.ne.s32.totalorder %s54, %s57
      %p63 = scmp.eq.s32.totalorder %s18, 0
      %p64 = por %p62, %p63
      %p65 = scmp.ne.s32.totalorder %s54, %s57
      %p66 = scmp.eq.s32.totalorder %s23, 1
      %p67 = por %p65, %p66
      %p68 = scmp.ne.s32.totalorder %s57, %s58
      %p69 = scmp.eq.s32.totalorder %s23, 0
      %p70 = por %p68, %p69
      %p71 = scmp.ne.s32.totalorder %s57, %s58
      %p72 = scmp.eq.s32.totalorder %s24, 1
      %p73 = por %p71, %p72
      %p75 = scmp.ne.s32.totalorder %s58, %s74
      %p76 = scmp.eq.s32.totalorder %s24, 0
      %p77 = por %p75, %p76
      %s78 = ssub.s32 %s18, %s25
      %p79 = scmp.eq.s32.totalorder %s78, 0
      %s81 = sadd.s32 %s80, 1
      %s82 = scalar_select %p79, %s80, %s81
      %p85 = pneg %p79
      %p86 = scmp.eq.s32.totalorder %s18, 1
      %p87 = por %p85, %p86
      %p88 = scmp.ne.s32.totalorder %s80, %s83
      %p89 = scmp.eq.s32.totalorder %s18, 0
      %p90 = por %p88, %p89
      %p91 = scmp.ne.s32.totalorder %s80, %s83
      %p92 = scmp.eq.s32.totalorder %s23, 1
      %p93 = por %p91, %p92
      %p94 = scmp.ne.s32.totalorder %s83, %s84
      %p95 = scmp.eq.s32.totalorder %s23, 0
      %p96 = por %p94, %p95
      %p97 = scmp.ne.s32.totalorder %s83, %s84
      %p98 = scmp.eq.s32.totalorder %s24, 1
      %p99 = por %p97, %p98
      %p101 = scmp.ne.s32.totalorder %s84, %s100
      %p102 = scmp.eq.s32.totalorder %s24, 0
      %p103 = por %p101, %p102
      %s104 = ssub.s32 %s18, %s25
      %p105 = scmp.eq.s32.totalorder %s104, 0
      %s107 = sadd.s32 %s106, 1
      %s108 = scalar_select %p105, %s106, %s107
      %p111 = pneg %p105
      %p112 = scmp.eq.s32.totalorder %s18, 1
      %p113 = por %p111, %p112
      %p114 = scmp.ne.s32.totalorder %s106, %s109
      %p115 = scmp.eq.s32.totalorder %s18, 0
      %p116 = por %p114, %p115
      %p117 = scmp.ne.s32.totalorder %s106, %s109
      %p118 = scmp.eq.s32.totalorder %s23, 1
      %p119 = por %p117, %p118
      %p120 = scmp.ne.s32.totalorder %s109, %s110
      %p121 = scmp.eq.s32.totalorder %s23, 0
      %p122 = por %p120, %p121
      %p123 = scmp.ne.s32.totalorder %s109, %s110
      %p124 = scmp.eq.s32.totalorder %s24, 1
      %p125 = por %p123, %p124
      %p127 = scmp.ne.s32.totalorder %s110, %s126
      %p128 = scmp.eq.s32.totalorder %s24, 0
      %p129 = por %p127, %p128
      %p130 = scmp.le.s32.totalorder 1, %s18
      %p131 = scmp.lt.s32.totalorder %s18, 3
      %p132 = pnand %p130, %p131
      %p133 = pneg %p132
      // Predicated region
      $region9: #{tpu_custom_call.1} parent=5 // pred_check
        _
      $region10: #{tpu_custom_call.1} parent=5 // pred_check_branch
        %135 = sbr.rel (%p132) target = $region12
      $region11: #{tpu_custom_call.1} parent=5 // pred_region
        %s136 = ssub.s32 %s18, 1
      $region12: #{tpu_custom_call.1} parent=5 // pred_fallthru
        _
      %p137 = scmp.lt.s32.totalorder %s18, 2
      // Predicated region
      $region13: #{tpu_custom_call.1} parent=5 // pred_check
        %p138 = pneg %p137
      $region14: #{tpu_custom_call.1} parent=5 // pred_check_branch
        %140 = sbr.rel (%p138) target = $region16
      $region15: #{tpu_custom_call.1} parent=5 // pred_region
        // Predicated region
        $region17: #{tpu_custom_call.1} parent=15 // pred_check
          %p141 = pneg %p38
        $region18: #{tpu_custom_call.1} parent=15 // pred_check_branch
          %143 = sbr.rel (%p141) target = $region20
        $region19: #{tpu_custom_call.1} parent=15 // pred_region
          %s144 = sand.u32 %s28, 1
          %s145 = scalar_lea.sflag [#allocation3], %s144
          %s146 = sand.u32 %s28, 1
          %s147 = smul.addr %s146, 64
          %s148 = scalar_lea.vmem [#allocation2], %s147
          %s150 = ssub.s32 1024, 1024
          %151 = vsyncadd %s145, %s150
          %s152 = smul.addr %s18, 8
          %s153 = smul.addr %s152, 128
          %s154 = scalar_lea.hbm %s0, %s153
          %s155 = sshll.u32 %s148, 4
          %s156 = int_to_ptr.vmem [resolvable:$true] %s155
          %161 = dma.hbm_to_vmem [thread:$0]  %s154, 1024, %s156, %s145, 128, 128, 8
        $region20: #{tpu_custom_call.1} parent=15 // pred_fallthru
          _
        // Predicated region
        $region21: #{tpu_custom_call.1} parent=15 // pred_check
          %p162 = pneg %p64
        $region22: #{tpu_custom_call.1} parent=15 // pred_check_branch
          %164 = sbr.rel (%p162) target = $region24
        $region23: #{tpu_custom_call.1} parent=15 // pred_region
          %s165 = sand.u32 %s18, 1
          %s166 = scalar_lea.sflag [#allocation6], %s165
          %s167 = sand.u32 %s54, 1
          %s168 = smul.addr %s167, 128
          %s169 = scalar_lea.vmem [#allocation5], %s168
          %s171 = ssub.s32 2048, 2048
          %172 = vsyncadd %s166, %s171
          %s173 = smul.addr %s18, 16
          %s174 = smul.addr %s173, 128
          %s175 = scalar_lea.hbm %s1, %s174
          %s176 = sshll.u32 %s169, 4
          %s177 = int_to_ptr.vmem [resolvable:$true] %s176
          %182 = dma.hbm_to_vmem [thread:$0]  %s175, 2048, %s177, %s166, 128, 128, 8
        $region24: #{tpu_custom_call.1} parent=15 // pred_fallthru
          _
        // Predicated region
        $region25: #{tpu_custom_call.1} parent=15 // pred_check
          %p183 = pneg %p90
        $region26: #{tpu_custom_call.1} parent=15 // pred_check_branch
          %185 = sbr.rel (%p183) target = $region28
        $region27: #{tpu_custom_call.1} parent=15 // pred_region
          %s186 = sand.u32 %s18, 1
          %s187 = scalar_lea.sflag [#allocation6], %s186
          %s188 = sand.u32 %s80, 1
          %s189 = smul.addr %s188, 128
          %s190 = scalar_lea.vmem [#allocation7], %s189
          %s192 = ssub.s32 2048, 2048
          %193 = vsyncadd %s187, %s192
          %s194 = smul.addr %s18, 16
          %s195 = smul.addr %s194, 128
          %s196 = scalar_lea.hbm %s2, %s195
          %s197 = sshll.u32 %s190, 4
          %s198 = int_to_ptr.vmem [resolvable:$true] %s197
          %203 = dma.hbm_to_vmem [thread:$0]  %s196, 2048, %s198, %s187, 128, 128, 8
        $region28: #{tpu_custom_call.1} parent=15 // pred_fallthru
          _
      $region16: #{tpu_custom_call.1} parent=5 // pred_fallthru
        _
      %p204 = scmp.le.s32.totalorder 1, %s18
      %p205 = scmp.lt.s32.totalorder %s18, 3
      %p206 = pnand %p204, %p205
      %p207 = pneg %p206
      // Predicated region
      $region29: #{tpu_custom_call.1} parent=5 // pred_check
        _
      $region30: #{tpu_custom_call.1} parent=5 // pred_check_branch
        %209 = sbr.rel (%p206) target = $region32
      $region31: #{tpu_custom_call.1} parent=5 // pred_region
        %s210 = ssub.s32 %s18, 1
        %s211 = sand.u32 %s31, 1
        %s212 = scalar_lea.sflag [#allocation3], %s211
        %s213 = sand.u32 %s31, 1
        %s214 = smul.addr %s213, 64
        %s215 = scalar_lea.vmem [#allocation2], %s214
        // Predicated region
        $region33: #{tpu_custom_call.1} parent=31 // pred_check
          %p216 = pneg %p44
        $region34: #{tpu_custom_call.1} parent=31 // pred_check_branch
          %218 = sbr.rel (%p216) target = $region36
        $region35: #{tpu_custom_call.1} parent=31 // pred_region
          %219 = dma.done %s212, 1024
        $region36: #{tpu_custom_call.1} parent=31 // pred_fallthru
          _
        %s220 = sand.u32 %s23, 1
        %s221 = scalar_lea.sflag [#allocation6], %s220
        %s222 = sand.u32 %s57, 1
        %s223 = smul.addr %s222, 128
        %s224 = scalar_lea.vmem [#allocation5], %s223
        // Predicated region
        $region37: #{tpu_custom_call.1} parent=31 // pred_check
          %p225 = pneg %p70
        $region38: #{tpu_custom_call.1} parent=31 // pred_check_branch
          %227 = sbr.rel (%p225) target = $region40
        $region39: #{tpu_custom_call.1} parent=31 // pred_region
          %228 = dma.done %s221, 2048
        $region40: #{tpu_custom_call.1} parent=31 // pred_fallthru
          _
        %s229 = sand.u32 %s23, 1
        %s230 = scalar_lea.sflag [#allocation6], %s229
        %s231 = sand.u32 %s83, 1
        %s232 = smul.addr %s231, 128
        %s233 = scalar_lea.vmem [#allocation7], %s232
        // Predicated region
        $region41: #{tpu_custom_call.1} parent=31 // pred_check
          %p234 = pneg %p96
        $region42: #{tpu_custom_call.1} parent=31 // pred_check_branch
          %236 = sbr.rel (%p234) target = $region44
        $region43: #{tpu_custom_call.1} parent=31 // pred_region
          %237 = dma.done %s230, 2048
        $region44: #{tpu_custom_call.1} parent=31 // pred_fallthru
          _
        %s238 = sand.u32 %s31, 1
        %s239 = scalar_lea.sflag [#allocation3], %s238
        %s240 = sand.u32 %s31, 1
        %s241 = smul.addr %s240, 64
        %s242 = scalar_lea.vmem [#allocation2], %s241
        %p243 = pneg %p44
        %p244 = pneg %p41
        %s245 = sand.u32 %s23, 1
        %s246 = scalar_lea.sflag [#allocation6], %s245
        %s247 = sand.u32 %s57, 1
        %s248 = smul.addr %s247, 128
        %s249 = scalar_lea.vmem [#allocation5], %s248
        %p250 = pneg %p70
        %p251 = pneg %p67
        %s252 = sand.u32 %s23, 1
        %s253 = scalar_lea.sflag [#allocation6], %s252
        %s254 = sand.u32 %s83, 1
        %s255 = smul.addr %s254, 128
        %s256 = scalar_lea.vmem [#allocation7], %s255
        %p257 = pneg %p96
        %p258 = pneg %p93
        %p259 = pneg %p122
        %p260 = pneg %p119
        %s261 = sand.u32 %s109, 1
        %s262 = scalar_lea.sflag [#allocation4], %s261
        %s263 = sand.u32 %s109, 1
        %s264 = smul.addr %s263, 32
        %s265 = scalar_lea.vmem [#allocation8], %s264
        %266 = vst [vmem:[%s265] sm:$0xff] 0.0
        %267 = vst [vmem:[%s265 + $0x8] sm:$0xff] 0.0
        %268 = vst [vmem:[%s265 + $0x10] sm:$0xff] 0.0
        %269 = vst [vmem:[%s265 + $0x18] sm:$0xff] 0.0
        %s270 = sand.u32 %s109, 1
        %s271 = scalar_lea.sflag [#allocation4], %s270
        %s272 = sand.u32 %s109, 1
        %s273 = smul.addr %s272, 32
        %s274 = scalar_lea.vmem [#allocation8], %s273
        // Predicated region
        $region45: #{tpu_custom_call.1} parent=31 // pred_check
          %p275 = pneg %p119
        $region46: #{tpu_custom_call.1} parent=31 // pred_check_branch
          %277 = sbr.rel (%p275) target = $region48
        $region47: #{tpu_custom_call.1} parent=31 // pred_region
          %s279 = ssub.s32 512, 512
          %280 = vsyncadd %s271, %s279
          %s281 = smul.addr %s23, 4
          %s282 = smul.addr %s281, 128
          %s283 = scalar_lea.hbm %s3, %s282
          %s284 = sshll.u32 %s274, 4
          %s285 = int_to_ptr.vmem [resolvable:$true] %s284
          %290 = dma.vmem_to_hbm [thread:$0]  %s285, 512, %s283, %s271, 256, 256, 16
        $region48: #{tpu_custom_call.1} parent=31 // pred_fallthru
          _
      $region32: #{tpu_custom_call.1} parent=5 // pred_fallthru
        _
      %p291 = scmp.le.s32.totalorder 2, %s18
      // Predicated region
      $region49: #{tpu_custom_call.1} parent=5 // pred_check
        %p292 = pneg %p291
      $region50: #{tpu_custom_call.1} parent=5 // pred_check_branch
        %294 = sbr.rel (%p292) target = $region52
      $region51: #{tpu_custom_call.1} parent=5 // pred_region
        %s295 = ssub.s32 %s18, 2
        // Predicated region
        $region53: #{tpu_custom_call.1} parent=51 // pred_check
          %p296 = pneg %p125
        $region54: #{tpu_custom_call.1} parent=51 // pred_check_branch
          %298 = sbr.rel (%p296) target = $region56
        $region55: #{tpu_custom_call.1} parent=51 // pred_region
          %s299 = sand.u32 %s110, 1
          %s300 = scalar_lea.sflag [#allocation4], %s299
          %s301 = sand.u32 %s110, 1
          %s302 = smul.addr %s301, 32
          %s303 = scalar_lea.vmem [#allocation8], %s302
          %304 = dma.done %s300, 512
        $region56: #{tpu_custom_call.1} parent=51 // pred_fallthru
          _
      $region52: #{tpu_custom_call.1} parent=5 // pred_fallthru
        _
    $region6: #{tpu_custom_call.1} parent=1 // loop_footer
      %s22 = sadd.s32 1, %s18
    $region7: #{tpu_custom_call.1} parent=1 // loop_footer_branch
      %17 = sbr.rel target = $region3
    $region8: #{tpu_custom_call.1} parent=1 // loop_exit
      _
    %305 = vsyncpa [#allocation3], 1
    %s306 = scalar_lea.sflag [#allocation3], 1
    %307 = vsyncpa %s306, 1
    %308 = vsyncpa [#allocation6], 1
    %s309 = scalar_lea.sflag [#allocation6], 1
    %310 = vsyncpa %s309, 1
    %311 = vsyncpa [#allocation4], 1
    %s312 = scalar_lea.sflag [#allocation4], 1
    %313 = vsyncpa %s312, 1

</llo_original>
